<compile_context>
chip_gen: v6e
topology: v6e:2x2x1
jax: 0.10.0
libtpu: 0.0.40
codegen_flags: <defaults>
</compile_context>

<pallas_src>
import jax
import jax.numpy as jnp
from jax.experimental import pallas as pl
from jax.experimental.pallas import tpu as pltpu


def _round_up(v, m):
    return (v + m - 1) // m * m


def _cdiv(a, b):
    return -(-a // b)


def _vmem_capacity_bytes():
    """Per-core VMEM capacity; conservative fallback if it can't be queried."""
    try:
        cap = int(pltpu.get_tpu_info().vmem_capacity_bytes)
    except Exception:
        cap = 64 * 1024 * 1024  # v7x per-TensorCore size = safe lower bound
    return max(32 * 1024 * 1024, min(cap, 128 * 1024 * 1024))


def _choose_tk(kp128, max_tk=2048):
    """K tile: <= max_tk, multiple of 256, minimizing padded-K waste."""
    if kp128 <= max_tk:
        return kp128
    best_tk, best_pad = max_tk, None
    for tk in range(max_tk, 1024 - 1, -256):
        pad = _round_up(kp128, tk) - kp128
        if best_pad is None or pad < best_pad:
            best_tk, best_pad = tk, pad
        if pad == 0:
            break
    return best_tk


def _choose_tb(B, desired=512):
    """Batch tile: multiple of 8; >=2 tiles when B >= 16 (v7x dual-TC);
    multiple of 256 for large batches when that keeps padding small."""
    b8 = _round_up(B, 8)
    if b8 < 16:
        return b8
    n_tiles = max(2, _cdiv(b8, desired))
    tb = _round_up(_cdiv(b8, n_tiles), 8)
    if tb > 256:
        tb_r = _round_up(tb, 256)  # MXU-width multiple on v6e/v7x
        if _round_up(B, tb_r) - B <= tb_r // 4:
            tb = tb_r
    return tb


def _classifier_kernel(x_ref, w1_ref, b1_ref, w2_ref, b2_ref, o_ref, acc_ref):
    k = pl.program_id(1)

    @pl.when(k == 0)
    def _init():
        # Seed the accumulator with the layer-1 bias: removes a (tb, Hp) f32
        # add from the finalize branch (which sits on the writeback path).
        acc_ref[...] = jnp.broadcast_to(b1_ref[...], acc_ref.shape)

    # ---- Linear(dim -> H): partial K contraction on the MXU, f32 accumulate.
    acc_ref[...] += jnp.dot(
        x_ref[...].astype(jnp.bfloat16), w1_ref[...],
        preferred_element_type=jnp.float32,
    )

    @pl.when(k == pl.num_programs(1) - 1)
    def _finalize():
        h = jnp.maximum(acc_ref[...], 0.0)  # ReLU in f32 (bias already in acc)
        # TODO(synk): Dropout(0.5) is eval-mode (identity). Training-mode parity
        # would need pltpu.prng_seed/prng_random_bits masking and a 2.0 scale.
        out = jnp.dot(
            h.astype(jnp.bfloat16), w2_ref[...],
            preferred_element_type=jnp.float32,
        ) + b2_ref[...]
        o_ref[...] = out.astype(o_ref.dtype)


def prepare_params(w1, b1, w2, b2, *, vmem_capacity_bytes=None, max_tk=2048):
    """One-time weight prep: zero-pad to lane-dense shapes and cast to bf16.

    Hoisted out of the per-call path so each forward call reads only the
    pre-padded bf16 weights from HBM (never the original f32 copies).
    Weights are stored [in_features, out_features] (transpose of PyTorch's
    [out, in]) so the kernel computes plain x @ W + b.
    """
    dim, H = w1.shape
    Hk, C = w2.shape
    assert Hk == H and b1.shape == (H,) and b2.shape == (C,)

    Hp = _round_up(H, 128)      # 1000 -> 1024: lane-dense hidden
    Cp = _round_up(C, 128)      # tiny n_classes -> lane-dense output
    kp128 = _round_up(dim, 128)

    cap = (vmem_capacity_bytes if vmem_capacity_bytes is not None
           else _vmem_capacity_bytes())
    # w1 becomes VMEM-resident (single K grid step -> one HBM read per call)
    # when its double-buffered bf16 block fits a conservative slice of VMEM;
    # otherwise it streams in big K tiles.
    if 2 * kp128 * Hp * 2 <= int(cap * 0.45):
        tk = kp128
    else:
        tk = _choose_tk(kp128, max_tk)
    Kp = _round_up(kp128, tk)

    w1_p = jnp.pad(w1, ((0, Kp - dim), (0, Hp - H))).astype(jnp.bfloat16)
    b1_p = jnp.pad(b1, (0, Hp - H)).reshape(1, Hp).astype(jnp.float32)
    w2_p = jnp.pad(w2, ((0, Hp - H), (0, Cp - C))).astype(jnp.bfloat16)
    b2_p = jnp.pad(b2, (0, Cp - C)).reshape(1, Cp).astype(jnp.float32)

    return {"w1": w1_p, "b1": b1_p, "w2": w2_p, "b2": b2_p,
            "dim": dim, "H": H, "C": C, "Kp": Kp, "Hp": Hp, "Cp": Cp, "tk": tk}


def classifier_forward(x, params, *, tb=None):
    """x: [B, dim] (f32 or bf16) -> [B, n_classes] in x.dtype (eval mode)."""
    B, dim = x.shape
    assert dim == params["dim"], "x feature dim does not match prepared params"
    Kp, Hp, Cp, tk, C = (params["Kp"], params["Hp"], params["Cp"],
                         params["tk"], params["C"])

    if tb is None:
        tb = _choose_tb(B)
    tb = max(8, _round_up(min(tb, _round_up(B, 8)), 8))
    Bp = _round_up(B, tb)

    # Only materialize a padded copy of x when padding is required; otherwise
    # stream it as-is and cast to bf16 inside the kernel (saves an HBM trip).
    if Bp != B or Kp != dim:
        x_in = jnp.pad(x, ((0, Bp - B), (0, Kp - dim))).astype(jnp.bfloat16)
    else:
        x_in = x

    # Actual VMEM footprint (double buffers + accumulator) + headroom, capped
    # below physical VMEM (v7x has only 64 MiB per TensorCore).
    x_item = jnp.dtype(x_in.dtype).itemsize
    footprint = (2 * tb * tk * x_item        # x tiles
                 + 2 * tk * Hp * 2           # w1 tiles (bf16)
                 + 2 * Hp * 4                # b1 (resident)
                 + 2 * Hp * Cp * 2           # w2 (bf16, resident)
                 + 2 * Cp * 4                # b2 (resident)
                 + 2 * tb * Cp * 4           # out tiles
                 + tb * Hp * 4)              # f32 accumulator scratch
    cap = _vmem_capacity_bytes()
    vmem_limit = min(int(cap * 0.85),
                     max(32 * 1024 * 1024, footprint + 8 * 1024 * 1024))

    grid = (Bp // tb, Kp // tk)

    out_p = pl.pallas_call(
        _classifier_kernel,
        out_shape=jax.ShapeDtypeStruct((Bp, Cp), jnp.float32),
        grid_spec=pltpu.PrefetchScalarGridSpec(
            num_scalar_prefetch=0,
            grid=grid,
            in_specs=[
                pl.BlockSpec((tb, tk), lambda i, k: (i, k)),   # x: B,K tiles
                pl.BlockSpec((tk, Hp), lambda i, k: (k, 0)),   # w1: K tiles
                pl.BlockSpec((1, Hp), lambda i, k: (0, 0)),    # b1: resident
                pl.BlockSpec((Hp, Cp), lambda i, k: (0, 0)),   # w2: resident
                pl.BlockSpec((1, Cp), lambda i, k: (0, 0)),    # b2: resident
            ],
            out_specs=pl.BlockSpec((tb, Cp), lambda i, k: (i, 0)),
            scratch_shapes=[pltpu.VMEM((tb, Hp), jnp.float32)],
        ),
        compiler_params=pltpu.CompilerParams(
            dimension_semantics=("parallel", "arbitrary"),
            vmem_limit_bytes=int(vmem_limit),
        ),
    )(x_in, params["w1"], params["b1"], params["w2"], params["b2"])

    return out_p[:B, :C].astype(x.dtype)


def init_params(key, dim, hidden, n_classes):
    """PyTorch nn.Linear default init: U(-1/sqrt(fan_in), 1/sqrt(fan_in))."""
    k1, k2, k3, k4 = jax.random.split(key, 4)
    bound1 = 1.0 / jnp.sqrt(dim)
    bound2 = 1.0 / jnp.sqrt(hidden)
    w1 = jax.random.uniform(k1, (dim, hidden), jnp.float32, -bound1, bound1)
    b1 = jax.random.uniform(k2, (hidden,), jnp.float32, -bound1, bound1)
    w2 = jax.random.uniform(k3, (hidden, n_classes), jnp.float32, -bound2, bound2)
    b2 = jax.random.uniform(k4, (n_classes,), jnp.float32, -bound2, bound2)
    return w1, b1, w2, b2


def _reference_bf16(x, w1, b1, w2, b2):
    """Pure-JAX reference with the same bf16-operand / f32-accumulate math."""
    h = jnp.dot(x.astype(jnp.bfloat16), w1.astype(jnp.bfloat16),
                preferred_element_type=jnp.float32) + b1
    h = jnp.maximum(h, 0.0)
    return jnp.dot(h.astype(jnp.bfloat16), w2.astype(jnp.bfloat16),
                   preferred_element_type=jnp.float32) + b2


if __name__ == "__main__":
    key = jax.random.PRNGKey(0)
    kx1, kp1, kx2, kp2 = jax.random.split(key, 4)
    hidden = 1000

    # --- Test 1: small shapes; w1 fully VMEM-resident (single K grid step) ---
    B, dim, n_classes = 2, 32, 2
    x = jax.random.normal(kx1, (B, dim), jnp.float32)
    w1, b1, w2, b2 = init_params(kp1, dim, hidden, n_classes)
    params = prepare_params(w1, b1, w2, b2)
    out = jax.block_until_ready(classifier_forward(x, params))
    assert out.shape == (B, n_classes)
    ref = _reference_bf16(x, w1, b1, w2, b2)
    assert jnp.allclose(out, ref, atol=2e-3, rtol=2e-3)
    ref_f32 = jnp.maximum(x @ w1 + b1, 0.0) @ w2 + b2
    assert jnp.allclose(out, ref_f32, atol=5e-2, rtol=5e-2)

    # --- Test 2: exercise the streamed multi-tile path (2 batch x 2 K tiles)
    #     by forcing a small VMEM budget in the one-time param prep. ---
    B2, dim2, n_classes2 = 48, 4096, 5
    x2 = jax.random.normal(kx2, (B2, dim2), jnp.float32)
    w1b, b1b, w2b, b2b = init_params(kp2, dim2, hidden, n_classes2)
    params2 = prepare_params(w1b, b1b, w2b, b2b,
                             vmem_capacity_bytes=16 * 1024 * 1024)
    assert params2["Kp"] // params2["tk"] > 1   # really streaming over K
    out2 = jax.block_until_ready(classifier_forward(x2, params2))
    assert out2.shape == (B2, n_classes2)
    ref2 = _reference_bf16(x2, w1b, b1b, w2b, b2b)
    assert jnp.allclose(out2, ref2, atol=3e-3, rtol=3e-3)

    print("KERNEL_OK")
</pallas_src>

<mosaic_0001>
module attributes {stable_mosaic.version = 11 : i64} {
  func.func @_classifier_kernel(%arg0: i32, %arg1: i32, %arg2: memref<8x128xbf16, #tpu.memory_space<vmem>>, %arg3: memref<128x1024xbf16, #tpu.memory_space<vmem>>, %arg4: memref<1x1024xf32, #tpu.memory_space<vmem>>, %arg5: memref<1024x128xbf16, #tpu.memory_space<vmem>>, %arg6: memref<1x128xf32, #tpu.memory_space<vmem>>, %arg7: memref<8x128xf32, #tpu.memory_space<vmem>>, %arg8: memref<8x1024xf32, #tpu.memory_space<vmem>>) attributes {dimension_semantics = [#tpu.dimension_semantics<parallel>, #tpu.dimension_semantics<arbitrary>], iteration_bounds = array<i64: 1, 1>, scalar_prefetch = 0 : i64, scratch_operands = 1 : i64, tpu.core_type = #tpu.core_type<tc>, window_params = [{transform_indices = @transform_0, window_bounds = array<i64: 8, 128>}, {transform_indices = @transform_1, window_bounds = array<i64: 128, 1024>}, {pipeline_mode = #tpu.pipeline_mode<synchronous>, transform_indices = @transform_2, window_bounds = array<i64: 1, 1024>}, {pipeline_mode = #tpu.pipeline_mode<synchronous>, transform_indices = @transform_3, window_bounds = array<i64: 1024, 128>}, {pipeline_mode = #tpu.pipeline_mode<synchronous>, transform_indices = @transform_4, window_bounds = array<i64: 1, 128>}, {transform_indices = @transform_5, window_bounds = array<i64: 8, 128>}]} {
    %c0_i32 = arith.constant 0 : i32
    %0 = arith.cmpi eq, %arg1, %c0_i32 : i32
    %1 = arith.extui %0 : i1 to i32
    %c0_i32_0 = arith.constant 0 : i32
    %2 = arith.cmpi ne, %1, %c0_i32_0 : i32
    scf.if %2 {
      %c0_10 = arith.constant 0 : index
      %c0_11 = arith.constant 0 : index
      %12 = vector.load %arg4[%c0_10, %c0_11] : memref<1x1024xf32, #tpu.memory_space<vmem>>, vector<1x1024xf32>
      %13 = vector.shape_cast %12 : vector<1x1024xf32> to vector<1x1024xf32>
      %14 = vector.broadcast %13 : vector<1x1024xf32> to vector<8x1024xf32>
      %c0_12 = arith.constant 0 : index
      %c0_13 = arith.constant 0 : index
      %15 = vector.load %arg8[%c0_12, %c0_13] : memref<8x1024xf32, #tpu.memory_space<vmem>>, vector<8x1024xf32>
      tpu.vector_store %arg8[%c0_12, %c0_13], %14 {strides = array<i32>} : memref<8x1024xf32, #tpu.memory_space<vmem>>, vector<8x1024xf32>,
    } else {
    }
    %c0 = arith.constant 0 : index
    %c0_1 = arith.constant 0 : index
    %3 = vector.load %arg8[%c0, %c0_1] : memref<8x1024xf32, #tpu.memory_space<vmem>>, vector<8x1024xf32>
    %c0_2 = arith.constant 0 : index
    %c0_3 = arith.constant 0 : index
    %4 = vector.load %arg2[%c0_2, %c0_3] : memref<8x128xbf16, #tpu.memory_space<vmem>>, vector<8x128xbf16>
    %c0_4 = arith.constant 0 : index
    %c0_5 = arith.constant 0 : index
    %5 = vector.load %arg3[%c0_4, %c0_5] : memref<128x1024xbf16, #tpu.memory_space<vmem>>, vector<128x1024xbf16>
    %cst = arith.constant dense<0.000000e+00> : vector<8x1024xf32>
    %6 = tpu.matmul %4, %5, %cst {dimension_numbers = #tpu.dot_dimension_numbers<[1], [0], [0], [1], [0, 0, 1, 1], [], []>} : vector<8x128xbf16>, vector<128x1024xbf16>, vector<8x1024xf32> -> vector<8x1024xf32>
    %7 = arith.addf %3, %6 : vector<8x1024xf32>
    %c0_6 = arith.constant 0 : index
    %c0_7 = arith.constant 0 : index
    %8 = vector.load %arg8[%c0_6, %c0_7] : memref<8x1024xf32, #tpu.memory_space<vmem>>, vector<8x1024xf32>
    tpu.vector_store %arg8[%c0_6, %c0_7], %7 {strides = array<i32>} : memref<8x1024xf32, #tpu.memory_space<vmem>>, vector<8x1024xf32>,
    %c0_i32_8 = arith.constant 0 : i32
    %9 = arith.cmpi eq, %arg1, %c0_i32_8 : i32
    %10 = arith.extui %9 : i1 to i32
    %c0_i32_9 = arith.constant 0 : i32
    %11 = arith.cmpi ne, %10, %c0_i32_9 : i32
    scf.if %11 {
      %c0_10 = arith.constant 0 : index
      %c0_11 = arith.constant 0 : index
      %12 = vector.load %arg8[%c0_10, %c0_11] : memref<8x1024xf32, #tpu.memory_space<vmem>>, vector<8x1024xf32>
      %cst_12 = arith.constant 0.000000e+00 : f32
      %13 = vector.broadcast %cst_12 : f32 to vector<8x1024xf32>
      %14 = arith.maximumf %12, %13 : vector<8x1024xf32>
      %15 = arith.truncf %14 : vector<8x1024xf32> to vector<8x1024xbf16>
      %c0_13 = arith.constant 0 : index
      %c0_14 = arith.constant 0 : index
      %16 = vector.load %arg5[%c0_13, %c0_14] : memref<1024x128xbf16, #tpu.memory_space<vmem>>, vector<1024x128xbf16>
      %cst_15 = arith.constant dense<0.000000e+00> : vector<8x128xf32>
      %17 = tpu.matmul %15, %16, %cst_15 {dimension_numbers = #tpu.dot_dimension_numbers<[1], [0], [0], [1], [0, 0, 1, 1], [], []>} : vector<8x1024xbf16>, vector<1024x128xbf16>, vector<8x128xf32> -> vector<8x128xf32>
      %c0_16 = arith.constant 0 : index
      %c0_17 = arith.constant 0 : index
      %18 = vector.load %arg6[%c0_16, %c0_17] : memref<1x128xf32, #tpu.memory_space<vmem>>, vector<1x128xf32>
      %19 = vector.broadcast %18 : vector<1x128xf32> to vector<8x128xf32>
      %20 = arith.addf %17, %19 : vector<8x128xf32>
      %c0_18 = arith.constant 0 : index
      %c0_19 = arith.constant 0 : index
      %21 = vector.load %arg7[%c0_18, %c0_19] : memref<8x128xf32, #tpu.memory_space<vmem>>, vector<8x128xf32>
      tpu.vector_store %arg7[%c0_18, %c0_19], %20 {strides = array<i32>} : memref<8x128xf32, #tpu.memory_space<vmem>>, vector<8x128xf32>,
    } else {
    }
    return
  }
  func.func @transform_0(%arg0: i32, %arg1: i32) -> (i32, i32) {
    %c0_i32 = arith.constant 0 : i32
    return %arg0, %arg1 : i32, i32
  }
  func.func @transform_1(%arg0: i32, %arg1: i32) -> (i32, i32) {
    %c0_i32 = arith.constant 0 : i32
    %c0_i32_0 = arith.constant 0 : i32
    return %arg1, %c0_i32 : i32, i32
  }
  func.func @transform_2(%arg0: i32, %arg1: i32) -> (i32, i32) {
    %c0_i32 = arith.constant 0 : i32
    %c0_i32_0 = arith.constant 0 : i32
    %c0_i32_1 = arith.constant 0 : i32
    return %c0_i32, %c0_i32_0 : i32, i32
  }
  func.func @transform_3(%arg0: i32, %arg1: i32) -> (i32, i32) {
    %c0_i32 = arith.constant 0 : i32
    %c0_i32_0 = arith.constant 0 : i32
    %c0_i32_1 = arith.constant 0 : i32
    return %c0_i32, %c0_i32_0 : i32, i32
  }
  func.func @transform_4(%arg0: i32, %arg1: i32) -> (i32, i32) {
    %c0_i32 = arith.constant 0 : i32
    %c0_i32_0 = arith.constant 0 : i32
    %c0_i32_1 = arith.constant 0 : i32
    return %c0_i32, %c0_i32_0 : i32, i32
  }
  func.func @transform_5(%arg0: i32, %arg1: i32) -> (i32, i32) {
    %c0_i32 = arith.constant 0 : i32
    %c0_i32_0 = arith.constant 0 : i32
    return %arg0, %c0_i32 : i32, i32
  }
}

</mosaic_0001>

<llo_original>
// kernel: tpu_custom_call.1
$region0: #{tpu_custom_call.1}
  #allocation0 [shape = 'u32[]', space=smem, size = 0x4, offset = 0x4, fixed_abs, tag = 'smem constant byte address 0x4 - core index']
  #allocation1 [shape = 'u32[144,128]{1,0:T(1,128)}', space=vmem, size = 0x12000, scoped, tag = 'internal scratch']
  #allocation2 [shape = 'f32[8,1024]{1,0:T(8,128)}', space=vmem, size = 0x8000, scoped, tag = 'scratch operand']
  %s0 = inlined_call_operand.hbm [shape: bf16[8,128], index: 0, kind: input, shape index: {}]
  %s1 = inlined_call_operand.hbm [shape: bf16[128,1024], index: 1, kind: input, shape index: {}]
  %s2 = inlined_call_operand.hbm [shape: f32[1,1024], index: 2, kind: input, shape index: {}]
  %s3 = inlined_call_operand.hbm [shape: bf16[1024,128], index: 3, kind: input, shape index: {}]
  %s4 = inlined_call_operand.vmem [shape: f32[1,128], index: 4, kind: input, shape index: {}]
  %s5 = inlined_call_operand.hbm [shape: f32[8,128], index: 5, kind: output, shape index: {}]
  %s6 = sld [smem:[#allocation0]]
  $region54: #{tpu_custom_call.1} parent=0
    _
  %s8 = ssub.s32 1, %s6
  %s9 = scalar_select 0, %s8, %s6
  $region1: #{tpu_custom_call.1} parent=0
    #allocation3 [shape = 'u8[2048]{0}', space=vmem, size = 0x800, scoped, tag = 'input window, operand 0, single buffered']
    #allocation4 [shape = 's32[1]{0}', space=sflag, size = 0x4, scoped, tag = 'scoped memory for tpu_custom_call.1']
    #allocation5 [shape = 's32[1]{0}', space=sflag, size = 0x4, scoped, tag = 'scoped memory for tpu_custom_call.1']
    #allocation6 [shape = 'u8[262144]{0}', space=vmem, size = 0x40000, scoped, tag = 'input window, operand 1, single buffered']
    #allocation7 [shape = 's32[1]{0}', space=sflag, size = 0x4, scoped, tag = 'scoped memory for tpu_custom_call.1']
    #allocation8 [shape = 'u8[4096]{0}', space=vmem, size = 0x1000, scoped, tag = 'input window, operand 2, single buffered']
    #allocation9 [shape = 'u8[262144]{0}', space=vmem, size = 0x40000, scoped, tag = 'input window, operand 3, single buffered']
    #allocation10 [shape = 's32[1]{0}', space=sflag, size = 0x4, scoped, tag = 'scoped memory for tpu_custom_call.1']
    #allocation11 [shape = 'u8[4096]{0}', space=vmem, size = 0x1000, scoped, tag = 'output window, operand 0, single buffered']
    %10 = vsyncpa [#allocation4], 0
    %11 = vsyncpa [#allocation7], 0
    %12 = vsyncpa [#allocation10], 0
    %13 = vsyncpa [#allocation5], 0
    // Predicated region
    $region2: #{tpu_custom_call.1} parent=1 // pred_check
      _
    $region3: #{tpu_custom_call.1} parent=1 // pred_check_branch
      %15 = sbr.rel (0) target = $region5
    $region4: #{tpu_custom_call.1} parent=1 // pred_region
      %s17 = ssub.s32 64, 64
      %18 = vsyncadd [#allocation4], %s17
      %s20 = sshll.u32 [#allocation3], 4
      %s21 = int_to_ptr.vmem [resolvable:$true] %s20
      %23 = dma.hbm_to_vmem [thread:$0]  %s0, 64, %s21, [#allocation4]
    $region5: #{tpu_custom_call.1} parent=1 // pred_fallthru
      _
    // Predicated region
    $region6: #{tpu_custom_call.1} parent=1 // pred_check
      _
    $region7: #{tpu_custom_call.1} parent=1 // pred_check_branch
      %25 = sbr.rel (0) target = $region9
    $region8: #{tpu_custom_call.1} parent=1 // pred_region
      %s27 = ssub.s32 8192, 8192
      %28 = vsyncadd [#allocation7], %s27
      %s29 = sshll.u32 [#allocation6], 4
      %s30 = int_to_ptr.vmem [resolvable:$true] %s29
      %35 = dma.hbm_to_vmem [thread:$0]  %s1, 8192, %s30, [#allocation7], 512, 512, 32
    $region9: #{tpu_custom_call.1} parent=1 // pred_fallthru
      _
    // Predicated region
    $region10: #{tpu_custom_call.1} parent=1 // pred_check
      _
    $region11: #{tpu_custom_call.1} parent=1 // pred_check_branch
      %37 = sbr.rel (0) target = $region13
    $region12: #{tpu_custom_call.1} parent=1 // pred_region
      %s39 = ssub.s32 128, 128
      %40 = vsyncadd [#allocation7], %s39
      %s42 = sshll.u32 [#allocation8], 4
      %s43 = int_to_ptr.vmem [resolvable:$true] %s42
      %45 = dma.hbm_to_vmem [thread:$0]  %s2, 128, %s43, [#allocation7]
    $region13: #{tpu_custom_call.1} parent=1 // pred_fallthru
      _
    // Predicated region
    $region14: #{tpu_custom_call.1} parent=1 // pred_check
      _
    $region15: #{tpu_custom_call.1} parent=1 // pred_check_branch
      %47 = sbr.rel (0) target = $region17
    $region16: #{tpu_custom_call.1} parent=1 // pred_region
      %s49 = ssub.s32 8192, 8192
      %50 = vsyncadd [#allocation10], %s49
      %s51 = sshll.u32 [#allocation9], 4
      %s52 = int_to_ptr.vmem [resolvable:$true] %s51
      %57 = dma.hbm_to_vmem [thread:$0]  %s3, 8192, %s52, [#allocation10], 64, 64, 4
    $region17: #{tpu_custom_call.1} parent=1 // pred_fallthru
      _
    // Predicated region
    $region18: #{tpu_custom_call.1} parent=1 // pred_check
      _
    $region19: #{tpu_custom_call.1} parent=1 // pred_check_branch
      %59 = sbr.rel (0) target = $region21
    $region20: #{tpu_custom_call.1} parent=1 // pred_region
      _
    $region21: #{tpu_custom_call.1} parent=1 // pred_fallthru
      _
    // Predicated region
    $region22: #{tpu_custom_call.1} parent=1 // pred_check
      _
    $region23: #{tpu_custom_call.1} parent=1 // pred_check_branch
      %61 = sbr.rel (0) target = $region25
    $region24: #{tpu_custom_call.1} parent=1 // pred_region
      %62 = dma.done [#allocation4], 64
    $region25: #{tpu_custom_call.1} parent=1 // pred_fallthru
      _
    // Predicated region
    $region26: #{tpu_custom_call.1} parent=1 // pred_check
      _
    $region27: #{tpu_custom_call.1} parent=1 // pred_check_branch
      %64 = sbr.rel (0) target = $region29
    $region28: #{tpu_custom_call.1} parent=1 // pred_region
      %65 = dma.done [#allocation7], 8192
    $region29: #{tpu_custom_call.1} parent=1 // pred_fallthru
      _
    // Predicated region
    $region30: #{tpu_custom_call.1} parent=1 // pred_check
      _
    $region31: #{tpu_custom_call.1} parent=1 // pred_check_branch
      %67 = sbr.rel (0) target = $region33
    $region32: #{tpu_custom_call.1} parent=1 // pred_region
      %68 = dma.done [#allocation7], 128
    $region33: #{tpu_custom_call.1} parent=1 // pred_fallthru
      _
    // Predicated region
    $region34: #{tpu_custom_call.1} parent=1 // pred_check
      _
    $region35: #{tpu_custom_call.1} parent=1 // pred_check_branch
      %70 = sbr.rel (0) target = $region37
    $region36: #{tpu_custom_call.1} parent=1 // pred_region
      %71 = dma.done [#allocation10], 8192
    $region37: #{tpu_custom_call.1} parent=1 // pred_fallthru
      _
    %p73 = scmp.eq.s32.totalorder 0, 0
    // Predicated region
    $region38: #{tpu_custom_call.1} parent=1 // pred_check
      %p74 = pneg %p73
    $region39: #{tpu_custom_call.1} parent=1 // pred_check_branch
      %76 = sbr.rel (%p74) target = $region41
    $region40: #{tpu_custom_call.1} parent=1 // pred_region
      %v77 = vld [vmem:[#allocation8] sm:$0xff]
      %v79 = vlaneseq
      %v80 = vshrl.u32 %v79, 7
      %v81 = vsub.s32 0, %v80
      %v82 = vrot.slane %v77, %v81
      %v83 = vlaneseq
      %v84 = vshrl.u32 %v83, 7
      %v85 = vsub.s32 1, %v84
      %v86 = vrot.slane %v77, %v85
      %v87 = vlaneseq
      %v88 = vshrl.u32 %v87, 7
      %v89 = vsub.s32 2, %v88
      %v90 = vrot.slane %v77, %v89
      %v91 = vlaneseq
      %v92 = vshrl.u32 %v91, 7
      %v93 = vsub.s32 3, %v92
      %v94 = vrot.slane %v77, %v93
      %v95 = vlaneseq
      %v96 = vshrl.u32 %v95, 7
      %v97 = vsub.s32 4, %v96
      %v98 = vrot.slane %v77, %v97
      %v99 = vlaneseq
      %v100 = vshrl.u32 %v99, 7
      %v101 = vsub.s32 5, %v100
      %v102 = vrot.slane %v77, %v101
      %v103 = vlaneseq
      %v104 = vshrl.u32 %v103, 7
      %v105 = vsub.s32 6, %v104
      %v106 = vrot.slane %v77, %v105
      %v107 = vlaneseq
      %v108 = vshrl.u32 %v107, 7
      %v109 = vsub.s32 7, %v108
      %v110 = vrot.slane %v77, %v109
      %119 = vst [vmem:[#allocation2] sm:$0xff] %v82
      %120 = vst [vmem:[#allocation2 + $0x8] sm:$0xff] %v86
      %121 = vst [vmem:[#allocation2 + $0x10] sm:$0xff] %v90
      %122 = vst [vmem:[#allocation2 + $0x18] sm:$0xff] %v94
      %123 = vst [vmem:[#allocation2 + $0x20] sm:$0xff] %v98
      %124 = vst [vmem:[#allocation2 + $0x28] sm:$0xff] %v102
      %125 = vst [vmem:[#allocation2 + $0x30] sm:$0xff] %v106
      %126 = vst [vmem:[#allocation2 + $0x38] sm:$0xff] %v110
    $region41: #{tpu_custom_call.1} parent=1 // pred_fallthru
      _
    %v127 = vld [vmem:[#allocation2] sm:$0xff]
    %v128 = vld [vmem:[#allocation2 + $0x8] sm:$0xff]
    %v129 = vld [vmem:[#allocation2 + $0x10] sm:$0xff]
    %v130 = vld [vmem:[#allocation2 + $0x18] sm:$0xff]
    %v131 = vld [vmem:[#allocation2 + $0x20] sm:$0xff]
    %v132 = vld [vmem:[#allocation2 + $0x28] sm:$0xff]
    %v133 = vld [vmem:[#allocation2 + $0x30] sm:$0xff]
    %v134 = vld [vmem:[#allocation2 + $0x38] sm:$0xff]
    %v135 = vld [vmem:[#allocation3] sm:$0xf]
    %v136 = vld [vmem:[#allocation6] sm:$0xff]
    %v137 = vld [vmem:[#allocation6 + $0x8] sm:$0xff]
    %v138 = vld [vmem:[#allocation6 + $0x10] sm:$0xff]
    %v139 = vld [vmem:[#allocation6 + $0x18] sm:$0xff]
    %v140 = vld [vmem:[#allocation6 + $0x20] sm:$0xff]
    %v141 = vld [vmem:[#allocation6 + $0x28] sm:$0xff]
    %v142 = vld [vmem:[#allocation6 + $0x30] sm:$0xff]
    %v143 = vld [vmem:[#allocation6 + $0x38] sm:$0xff]
    %v144 = vld [vmem:[#allocation6 + $0x40] sm:$0xff]
    %v145 = vld [vmem:[#allocation6 + $0x48] sm:$0xff]
    %v146 = vld [vmem:[#allocation6 + $0x50] sm:$0xff]
    %v147 = vld [vmem:[#allocation6 + $0x58] sm:$0xff]
    %v148 = vld [vmem:[#allocation6 + $0x60] sm:$0xff]
    %v149 = vld [vmem:[#allocation6 + $0x68] sm:$0xff]
    %v150 = vld [vmem:[#allocation6 + $0x70] sm:$0xff]
    %v151 = vld [vmem:[#allocation6 + $0x78] sm:$0xff]
    %v152 = vld [vmem:[#allocation6 + $0x80] sm:$0xff]
    %v153 = vld [vmem:[#allocation6 + $0x88] sm:$0xff]
    %v154 = vld [vmem:[#allocation6 + $0x90] sm:$0xff]
    %v155 = vld [vmem:[#allocation6 + $0x98] sm:$0xff]
    %v156 = vld [vmem:[#allocation6 + $0xa0] sm:$0xff]
    %v157 = vld [vmem:[#allocation6 + $0xa8] sm:$0xff]
    %v158 = vld [vmem:[#allocation6 + $0xb0] sm:$0xff]
    %v159 = vld [vmem:[#allocation6 + $0xb8] sm:$0xff]
    %v160 = vld [vmem:[#allocation6 + $0xc0] sm:$0xff]
    %v161 = vld [vmem:[#allocation6 + $0xc8] sm:$0xff]
    %v162 = vld [vmem:[#allocation6 + $0xd0] sm:$0xff]
    %v163 = vld [vmem:[#allocation6 + $0xd8] sm:$0xff]
    %v164 = vld [vmem:[#allocation6 + $0xe0] sm:$0xff]
    %v165 = vld [vmem:[#allocation6 + $0xe8] sm:$0xff]
    %v166 = vld [vmem:[#allocation6 + $0xf0] sm:$0xff]
    %v167 = vld [vmem:[#allocation6 + $0xf8] sm:$0xff]
    %v168 = vld [vmem:[#allocation6 + $0x100] sm:$0xff]
    %v169 = vld [vmem:[#allocation6 + $0x108] sm:$0xff]
    %v170 = vld [vmem:[#allocation6 + $0x110] sm:$0xff]
    %v171 = vld [vmem:[#allocation6 + $0x118] sm:$0xff]
    %v172 = vld [vmem:[#allocation6 + $0x120] sm:$0xff]
    %v173 = vld [vmem:[#allocation6 + $0x128] sm:$0xff]
    %v174 = vld [vmem:[#allocation6 + $0x130] sm:$0xff]
    %v175 = vld [vmem:[#allocation6 + $0x138] sm:$0xff]
    %v176 = vld [vmem:[#allocation6 + $0x140] sm:$0xff]
    %v177 = vld [vmem:[#allocation6 + $0x148] sm:$0xff]
    %v178 = vld [vmem:[#allocation6 + $0x150] sm:$0xff]
    %v179 = vld [vmem:[#allocation6 + $0x158] sm:$0xff]
    %v180 = vld [vmem:[#allocation6 + $0x160] sm:$0xff]
    %v181 = vld [vmem:[#allocation6 + $0x168] sm:$0xff]
    %v182 = vld [vmem:[#allocation6 + $0x170] sm:$0xff]
    %v183 = vld [vmem:[#allocation6 + $0x178] sm:$0xff]
    %v184 = vld [vmem:[#allocation6 + $0x180] sm:$0xff]
    %v185 = vld [vmem:[#allocation6 + $0x188] sm:$0xff]
    %v186 = vld [vmem:[#allocation6 + $0x190] sm:$0xff]
    %v187 = vld [vmem:[#allocation6 + $0x198] sm:$0xff]
    %v188 = vld [vmem:[#allocation6 + $0x1a0] sm:$0xff]
    %v189 = vld [vmem:[#allocation6 + $0x1a8] sm:$0xff]
    %v190 = vld [vmem:[#allocation6 + $0x1b0] sm:$0xff]
    %v191 = vld [vmem:[#allocation6 + $0x1b8] sm:$0xff]
    %v192 = vld [vmem:[#allocation6 + $0x1c0] sm:$0xff]
    %v193 = vld [vmem:[#allocation6 + $0x1c8] sm:$0xff]
    %v194 = vld [vmem:[#allocation6 + $0x1d0] sm:$0xff]
    %v195 = vld [vmem:[#allocation6 + $0x1d8] sm:$0xff]
    %v196 = vld [vmem:[#allocation6 + $0x1e0] sm:$0xff]
    %v197 = vld [vmem:[#allocation6 + $0x1e8] sm:$0xff]
    %v198 = vld [vmem:[#allocation6 + $0x1f0] sm:$0xff]
    %v199 = vld [vmem:[#allocation6 + $0x1f8] sm:$0xff]
    %v264 = vunpack.c.l.b16 %v136
    %v265 = vunpack.c.h.b16 %v136
    %v266 = vunpack.c.l.b16 %v137
    %v267 = vunpack.c.h.b16 %v137
    %v268 = vunpack.c.l.b16 %v138
    %v269 = vunpack.c.h.b16 %v138
    %v270 = vunpack.c.l.b16 %v139
    %v271 = vunpack.c.h.b16 %v139
    %v272 = vunpack.c.l.b16 %v140
    %v273 = vunpack.c.h.b16 %v140
    %v274 = vunpack.c.l.b16 %v141
    %v275 = vunpack.c.h.b16 %v141
    %v276 = vunpack.c.l.b16 %v142
    %v277 = vunpack.c.h.b16 %v142
    %v278 = vunpack.c.l.b16 %v143
    %v279 = vunpack.c.h.b16 %v143
    %v280 = vunpack.c.l.b16 %v144
    %v281 = vunpack.c.h.b16 %v144
    %v282 = vunpack.c.l.b16 %v145
    %v283 = vunpack.c.h.b16 %v145
    %v284 = vunpack.c.l.b16 %v146
    %v285 = vunpack.c.h.b16 %v146
    %v286 = vunpack.c.l.b16 %v147
    %v287 = vunpack.c.h.b16 %v147
    %v288 = vunpack.c.l.b16 %v148
    %v289 = vunpack.c.h.b16 %v148
    %v290 = vunpack.c.l.b16 %v149
    %v291 = vunpack.c.h.b16 %v149
    %v292 = vunpack.c.l.b16 %v150
    %v293 = vunpack.c.h.b16 %v150
    %v294 = vunpack.c.l.b16 %v151
    %v295 = vunpack.c.h.b16 %v151
    %v296 = vunpack.c.l.b16 %v152
    %v297 = vunpack.c.h.b16 %v152
    %v298 = vunpack.c.l.b16 %v153
    %v299 = vunpack.c.h.b16 %v153
    %v300 = vunpack.c.l.b16 %v154
    %v301 = vunpack.c.h.b16 %v154
    %v302 = vunpack.c.l.b16 %v155
    %v303 = vunpack.c.h.b16 %v155
    %v304 = vunpack.c.l.b16 %v156
    %v305 = vunpack.c.h.b16 %v156
    %v306 = vunpack.c.l.b16 %v157
    %v307 = vunpack.c.h.b16 %v157
    %v308 = vunpack.c.l.b16 %v158
    %v309 = vunpack.c.h.b16 %v158
    %v310 = vunpack.c.l.b16 %v159
    %v311 = vunpack.c.h.b16 %v159
    %v312 = vunpack.c.l.b16 %v160
    %v313 = vunpack.c.h.b16 %v160
    %v314 = vunpack.c.l.b16 %v161
    %v315 = vunpack.c.h.b16 %v161
    %v316 = vunpack.c.l.b16 %v162
    %v317 = vunpack.c.h.b16 %v162
    %v318 = vunpack.c.l.b16 %v163
    %v319 = vunpack.c.h.b16 %v163
    %v320 = vunpack.c.l.b16 %v164
    %v321 = vunpack.c.h.b16 %v164
    %v322 = vunpack.c.l.b16 %v165
    %v323 = vunpack.c.h.b16 %v165
    %v324 = vunpack.c.l.b16 %v166
    %v325 = vunpack.c.h.b16 %v166
    %v326 = vunpack.c.l.b16 %v167
    %v327 = vunpack.c.h.b16 %v167
    %v328 = vunpack.c.l.b16 %v168
    %v329 = vunpack.c.h.b16 %v168
    %v330 = vunpack.c.l.b16 %v169
    %v331 = vunpack.c.h.b16 %v169
    %v332 = vunpack.c.l.b16 %v170
    %v333 = vunpack.c.h.b16 %v170
    %v334 = vunpack.c.l.b16 %v171
    %v335 = vunpack.c.h.b16 %v171
    %v336 = vunpack.c.l.b16 %v172
    %v337 = vunpack.c.h.b16 %v172
    %v338 = vunpack.c.l.b16 %v173
    %v339 = vunpack.c.h.b16 %v173
    %v340 = vunpack.c.l.b16 %v174
    %v341 = vunpack.c.h.b16 %v174
    %v342 = vunpack.c.l.b16 %v175
    %v343 = vunpack.c.h.b16 %v175
    %v344 = vunpack.c.l.b16 %v176
    %v345 = vunpack.c.h.b16 %v176
    %v346 = vunpack.c.l.b16 %v177
    %v347 = vunpack.c.h.b16 %v177
    %v348 = vunpack.c.l.b16 %v178
    %v349 = vunpack.c.h.b16 %v178
    %v350 = vunpack.c.l.b16 %v179
    %v351 = vunpack.c.h.b16 %v179
    %v352 = vunpack.c.l.b16 %v180
    %v353 = vunpack.c.h.b16 %v180
    %v354 = vunpack.c.l.b16 %v181
    %v355 = vunpack.c.h.b16 %v181
    %v356 = vunpack.c.l.b16 %v182
    %v357 = vunpack.c.h.b16 %v182
    %v358 = vunpack.c.l.b16 %v183
    %v359 = vunpack.c.h.b16 %v183
    %v360 = vunpack.c.l.b16 %v184
    %v361 = vunpack.c.h.b16 %v184
    %v362 = vunpack.c.l.b16 %v185
    %v363 = vunpack.c.h.b16 %v185
    %v364 = vunpack.c.l.b16 %v186
    %v365 = vunpack.c.h.b16 %v186
    %v366 = vunpack.c.l.b16 %v187
    %v367 = vunpack.c.h.b16 %v187
    %v368 = vunpack.c.l.b16 %v188
    %v369 = vunpack.c.h.b16 %v188
    %v370 = vunpack.c.l.b16 %v189
    %v371 = vunpack.c.h.b16 %v189
    %v372 = vunpack.c.l.b16 %v190
    %v373 = vunpack.c.h.b16 %v190
    %v374 = vunpack.c.l.b16 %v191
    %v375 = vunpack.c.h.b16 %v191
    %v376 = vunpack.c.l.b16 %v192
    %v377 = vunpack.c.h.b16 %v192
    %v378 = vunpack.c.l.b16 %v193
    %v379 = vunpack.c.h.b16 %v193
    %v380 = vunpack.c.l.b16 %v194
    %v381 = vunpack.c.h.b16 %v194
    %v382 = vunpack.c.l.b16 %v195
    %v383 = vunpack.c.h.b16 %v195
    %v384 = vunpack.c.l.b16 %v196
    %v385 = vunpack.c.h.b16 %v196
    %v386 = vunpack.c.l.b16 %v197
    %v387 = vunpack.c.h.b16 %v197
    %v388 = vunpack.c.l.b16 %v198
    %v389 = vunpack.c.h.b16 %v198
    %v390 = vunpack.c.l.b16 %v199
    %v391 = vunpack.c.h.b16 %v199
    %v392 = vpack.c.b16 %v272, %v264
    %v393 = vpack.c.b16 %v273, %v265
    %v394 = vpack.c.b16 %v274, %v266
    %v395 = vpack.c.b16 %v275, %v267
    %v396 = vpack.c.b16 %v276, %v268
    %v397 = vpack.c.b16 %v277, %v269
    %v398 = vpack.c.b16 %v278, %v270
    %v399 = vpack.c.b16 %v279, %v271
    %v400 = vpack.c.b16 %v288, %v280
    %v401 = vpack.c.b16 %v289, %v281
    %v402 = vpack.c.b16 %v290, %v282
    %v403 = vpack.c.b16 %v291, %v283
    %v404 = vpack.c.b16 %v292, %v284
    %v405 = vpack.c.b16 %v293, %v285
    %v406 = vpack.c.b16 %v294, %v286
    %v407 = vpack.c.b16 %v295, %v287
    %v408 = vpack.c.b16 %v304, %v296
    %v409 = vpack.c.b16 %v305, %v297
    %v410 = vpack.c.b16 %v306, %v298
    %v411 = vpack.c.b16 %v307, %v299
    %v412 = vpack.c.b16 %v308, %v300
    %v413 = vpack.c.b16 %v309, %v301
    %v414 = vpack.c.b16 %v310, %v302
    %v415 = vpack.c.b16 %v311, %v303
    %v416 = vpack.c.b16 %v320, %v312
    %v417 = vpack.c.b16 %v321, %v313
    %v418 = vpack.c.b16 %v322, %v314
    %v419 = vpack.c.b16 %v323, %v315
    %v420 = vpack.c.b16 %v324, %v316
    %v421 = vpack.c.b16 %v325, %v317
    %v422 = vpack.c.b16 %v326, %v318
    %v423 = vpack.c.b16 %v327, %v319
    %v424 = vpack.c.b16 %v336, %v328
    %v425 = vpack.c.b16 %v337, %v329
    %v426 = vpack.c.b16 %v338, %v330
    %v427 = vpack.c.b16 %v339, %v331
    %v428 = vpack.c.b16 %v340, %v332
    %v429 = vpack.c.b16 %v341, %v333
    %v430 = vpack.c.b16 %v342, %v334
    %v431 = vpack.c.b16 %v343, %v335
    %v432 = vpack.c.b16 %v352, %v344
    %v433 = vpack.c.b16 %v353, %v345
    %v434 = vpack.c.b16 %v354, %v346
    %v435 = vpack.c.b16 %v355, %v347
    %v436 = vpack.c.b16 %v356, %v348
    %v437 = vpack.c.b16 %v357, %v349
    %v438 = vpack.c.b16 %v358, %v350
    %v439 = vpack.c.b16 %v359, %v351
    %v440 = vpack.c.b16 %v368, %v360
    %v441 = vpack.c.b16 %v369, %v361
    %v442 = vpack.c.b16 %v370, %v362
    %v443 = vpack.c.b16 %v371, %v363
    %v444 = vpack.c.b16 %v372, %v364
    %v445 = vpack.c.b16 %v373, %v365
    %v446 = vpack.c.b16 %v374, %v366
    %v447 = vpack.c.b16 %v375, %v367
    %v448 = vpack.c.b16 %v384, %v376
    %v449 = vpack.c.b16 %v385, %v377
    %v450 = vpack.c.b16 %v386, %v378
    %v451 = vpack.c.b16 %v387, %v379
    %v452 = vpack.c.b16 %v388, %v380
    %v453 = vpack.c.b16 %v389, %v381
    %v454 = vpack.c.b16 %v390, %v382
    %v455 = vpack.c.b16 %v391, %v383
    %520 = vmatprep.subr.bf16.mxu0 %v449
    %521 = vmatpush1.bf16.msra.mxu0 %v448
    %522 = vmatprep.subr.bf16.mxu0 %v441
    %523 = vmatpush1.bf16.msra.mxu0 %v440
    %524 = vmatprep.subr.bf16.mxu0 %v433
    %525 = vmatpush1.bf16.msra.mxu0 %v432
    %526 = vmatprep.subr.bf16.mxu0 %v425
    %527 = vmatpush1.bf16.msra.mxu0 %v424
    %528 = vmatprep.subr.bf16.mxu0 %v417
    %529 = vmatpush1.bf16.msra.mxu0 %v416
    %530 = vmatprep.subr.bf16.mxu0 %v409
    %531 = vmatpush1.bf16.msra.mxu0 %v408
    %532 = vmatprep.subr.bf16.mxu0 %v401
    %533 = vmatpush1.bf16.msra.mxu0 %v400
    %534 = vmatprep.subr.bf16.mxu0 %v393
    %535 = vmatpush1.bf16.msra.mxu0 %v392
    %536 = vmatprep.subr.bf16.mxu0 0
    %537 = vmatpush2.bf16.msra.mxu0 0
    %538 = vmatprep.subr.bf16.mxu0 0
    %539 = vmatpush2.bf16.msra.mxu0 0
    %540 = vmatprep.subr.bf16.mxu0 0
    %541 = vmatpush2.bf16.msra.mxu0 0
    %542 = vmatprep.subr.bf16.mxu0 0
    %543 = vmatpush2.bf16.msra.mxu0 0
    %544 = vmatprep.subr.bf16.mxu0 0
    %545 = vmatpush2.bf16.msra.mxu0 0
    %546 = vmatprep.subr.bf16.mxu0 0
    %547 = vmatpush2.bf16.msra.mxu0 0
    %548 = vmatprep.subr.bf16.mxu0 0
    %549 = vmatpush2.bf16.msra.mxu0 0
    %550 = vmatprep.subr.bf16.mxu0 0
    %551 = vmatpush2.bf16.msra.mxu0 0
    %552 = vmatprep.mubr.bf16.mxu0 0
    %553 = vmatmul.mubr.bf16.gmra.mxu0 %v135
    %v554 = vpop.f32.mrf.mxu0
    %v555 = vadd.f32 0.0, %v554
    %v556 = vpop.f32.mrf.mxu0
    %v557 = vadd.f32 0.0, %v556
    %v558 = vpop.f32.mrf.mxu0
    %v559 = vpop.f32.mrf.mxu0
    %560 = vdwg.mxu0
    %561 = vmatprep.subr.bf16.mxu0 %v451
    %562 = vmatpush1.bf16.msra.mxu0 %v450
    %563 = vmatprep.subr.bf16.mxu0 %v443
    %564 = vmatpush1.bf16.msra.mxu0 %v442
    %565 = vmatprep.subr.bf16.mxu0 %v435
    %566 = vmatpush1.bf16.msra.mxu0 %v434
    %567 = vmatprep.subr.bf16.mxu0 %v427
    %568 = vmatpush1.bf16.msra.mxu0 %v426
    %569 = vmatprep.subr.bf16.mxu0 %v419
    %570 = vmatpush1.bf16.msra.mxu0 %v418
    %571 = vmatprep.subr.bf16.mxu0 %v411
    %572 = vmatpush1.bf16.msra.mxu0 %v410
    %573 = vmatprep.subr.bf16.mxu0 %v403
    %574 = vmatpush1.bf16.msra.mxu0 %v402
    %575 = vmatprep.subr.bf16.mxu0 %v395
    %576 = vmatpush1.bf16.msra.mxu0 %v394
    %577 = vmatprep.subr.bf16.mxu0 0
    %578 = vmatpush2.bf16.msra.mxu0 0
    %579 = vmatprep.subr.bf16.mxu0 0
    %580 = vmatpush2.bf16.msra.mxu0 0
    %581 = vmatprep.subr.bf16.mxu0 0
    %582 = vmatpush2.bf16.msra.mxu0 0
    %583 = vmatprep.subr.bf16.mxu0 0
    %584 = vmatpush2.bf16.msra.mxu0 0
    %585 = vmatprep.subr.bf16.mxu0 0
    %586 = vmatpush2.bf16.msra.mxu0 0
    %587 = vmatprep.subr.bf16.mxu0 0
    %588 = vmatpush2.bf16.msra.mxu0 0
    %589 = vmatprep.subr.bf16.mxu0 0
    %590 = vmatpush2.bf16.msra.mxu0 0
    %591 = vmatprep.subr.bf16.mxu0 0
    %592 = vmatpush2.bf16.msra.mxu0 0
    %593 = vmatprep.mubr.bf16.mxu0 0
    %594 = vmatmul.mubr.bf16.gmra.mxu0 %v135
    %v595 = vpop.f32.mrf.mxu0
    %v596 = vadd.f32 0.0, %v595
    %v597 = vpop.f32.mrf.mxu0
    %v598 = vadd.f32 0.0, %v597
    %v599 = vpop.f32.mrf.mxu0
    %v600 = vpop.f32.mrf.mxu0
    %601 = vdwg.mxu0
    %602 = vmatprep.subr.bf16.mxu0 %v453
    %603 = vmatpush1.bf16.msra.mxu0 %v452
    %604 = vmatprep.subr.bf16.mxu0 %v445
    %605 = vmatpush1.bf16.msra.mxu0 %v444
    %606 = vmatprep.subr.bf16.mxu0 %v437
    %607 = vmatpush1.bf16.msra.mxu0 %v436
    %608 = vmatprep.subr.bf16.mxu0 %v429
    %609 = vmatpush1.bf16.msra.mxu0 %v428
    %610 = vmatprep.subr.bf16.mxu0 %v421
    %611 = vmatpush1.bf16.msra.mxu0 %v420
    %612 = vmatprep.subr.bf16.mxu0 %v413
    %613 = vmatpush1.bf16.msra.mxu0 %v412
    %614 = vmatprep.subr.bf16.mxu0 %v405
    %615 = vmatpush1.bf16.msra.mxu0 %v404
    %616 = vmatprep.subr.bf16.mxu0 %v397
    %617 = vmatpush1.bf16.msra.mxu0 %v396
    %618 = vmatprep.subr.bf16.mxu0 0
    %619 = vmatpush2.bf16.msra.mxu0 0
    %620 = vmatprep.subr.bf16.mxu0 0
    %621 = vmatpush2.bf16.msra.mxu0 0
    %622 = vmatprep.subr.bf16.mxu0 0
    %623 = vmatpush2.bf16.msra.mxu0 0
    %624 = vmatprep.subr.bf16.mxu0 0
    %625 = vmatpush2.bf16.msra.mxu0 0
    %626 = vmatprep.subr.bf16.mxu0 0
    %627 = vmatpush2.bf16.msra.mxu0 0
    %628 = vmatprep.subr.bf16.mxu0 0
    %629 = vmatpush2.bf16.msra.mxu0 0
    %630 = vmatprep.subr.bf16.mxu0 0
    %631 = vmatpush2.bf16.msra.mxu0 0
    %632 = vmatprep.subr.bf16.mxu0 0
    %633 = vmatpush2.bf16.msra.mxu0 0
    %634 = vmatprep.mubr.bf16.mxu0 0
    %635 = vmatmul.mubr.bf16.gmra.mxu0 %v135
    %v636 = vpop.f32.mrf.mxu0
    %v637 = vadd.f32 0.0, %v636
    %v638 = vpop.f32.mrf.mxu0
    %v639 = vadd.f32 0.0, %v638
    %v640 = vpop.f32.mrf.mxu0
    %v641 = vpop.f32.mrf.mxu0
    %642 = vdwg.mxu0
    %643 = vmatprep.subr.bf16.mxu0 %v455
    %644 = vmatpush1.bf16.msra.mxu0 %v454
    %645 = vmatprep.subr.bf16.mxu0 %v447
    %646 = vmatpush1.bf16.msra.mxu0 %v446
    %647 = vmatprep.subr.bf16.mxu0 %v439
    %648 = vmatpush1.bf16.msra.mxu0 %v438
    %649 = vmatprep.subr.bf16.mxu0 %v431
    %650 = vmatpush1.bf16.msra.mxu0 %v430
    %651 = vmatprep.subr.bf16.mxu0 %v423
    %652 = vmatpush1.bf16.msra.mxu0 %v422
    %653 = vmatprep.subr.bf16.mxu0 %v415
    %654 = vmatpush1.bf16.msra.mxu0 %v414
    %655 = vmatprep.subr.bf16.mxu0 %v407
    %656 = vmatpush1.bf16.msra.mxu0 %v406
    %657 = vmatprep.subr.bf16.mxu0 %v399
    %658 = vmatpush1.bf16.msra.mxu0 %v398
    %659 = vmatprep.subr.bf16.mxu0 0
    %660 = vmatpush2.bf16.msra.mxu0 0
    %661 = vmatprep.subr.bf16.mxu0 0
    %662 = vmatpush2.bf16.msra.mxu0 0
    %663 = vmatprep.subr.bf16.mxu0 0
    %664 = vmatpush2.bf16.msra.mxu0 0
    %665 = vmatprep.subr.bf16.mxu0 0
    %666 = vmatpush2.bf16.msra.mxu0 0
    %667 = vmatprep.subr.bf16.mxu0 0
    %668 = vmatpush2.bf16.msra.mxu0 0
    %669 = vmatprep.subr.bf16.mxu0 0
    %670 = vmatpush2.bf16.msra.mxu0 0
    %671 = vmatprep.subr.bf16.mxu0 0
    %672 = vmatpush2.bf16.msra.mxu0 0
    %673 = vmatprep.subr.bf16.mxu0 0
    %674 = vmatpush2.bf16.msra.mxu0 0
    %675 = vmatprep.mubr.bf16.mxu0 0
    %676 = vmatmul.mubr.bf16.gmra.mxu0 %v135
    %v677 = vpop.f32.mrf.mxu0
    %v678 = vadd.f32 0.0, %v677
    %v679 = vpop.f32.mrf.mxu0
    %v680 = vadd.f32 0.0, %v679
    %v681 = vpop.f32.mrf.mxu0
    %v682 = vpop.f32.mrf.mxu0
    %683 = vdwg.mxu0
    %v684 = vadd.f32 %v127, %v555
    %v685 = vadd.f32 %v128, %v557
    %v686 = vadd.f32 %v129, %v596
    %v687 = vadd.f32 %v130, %v598
    %v688 = vadd.f32 %v131, %v637
    %v689 = vadd.f32 %v132, %v639
    %v690 = vadd.f32 %v133, %v678
    %v691 = vadd.f32 %v134, %v680
    %692 = vst [vmem:[#allocation2] sm:$0xff] %v684
    %693 = vst [vmem:[#allocation2 + $0x8] sm:$0xff] %v685
    %694 = vst [vmem:[#allocation2 + $0x10] sm:$0xff] %v686
    %695 = vst [vmem:[#allocation2 + $0x18] sm:$0xff] %v687
    %696 = vst [vmem:[#allocation2 + $0x20] sm:$0xff] %v688
    %697 = vst [vmem:[#allocation2 + $0x28] sm:$0xff] %v689
    %698 = vst [vmem:[#allocation2 + $0x30] sm:$0xff] %v690
    %699 = vst [vmem:[#allocation2 + $0x38] sm:$0xff] %v691
    // Predicated region
    $region42: #{tpu_custom_call.1} parent=1 // pred_check
      %p700 = pneg %p73
    $region43: #{tpu_custom_call.1} parent=1 // pred_check_branch
      %702 = sbr.rel (%p700) target = $region45
    $region44: #{tpu_custom_call.1} parent=1 // pred_region
      %v703 = vld [vmem:[#allocation2] sm:$0xff]
      %v704 = vld [vmem:[#allocation2 + $0x8] sm:$0xff]
      %v705 = vld [vmem:[#allocation2 + $0x10] sm:$0xff]
      %v706 = vld [vmem:[#allocation2 + $0x18] sm:$0xff]
      %v707 = vld [vmem:[#allocation2 + $0x20] sm:$0xff]
      %v708 = vld [vmem:[#allocation2 + $0x28] sm:$0xff]
      %v709 = vld [vmem:[#allocation2 + $0x30] sm:$0xff]
      %v710 = vld [vmem:[#allocation2 + $0x38] sm:$0xff]
      %v711 = vmax.f32 %v703, 0.0
      %v712 = vmax.f32 %v704, 0.0
      %v713 = vmax.f32 %v705, 0.0
      %v714 = vmax.f32 %v706, 0.0
      %v715 = vmax.f32 %v707, 0.0
      %v716 = vmax.f32 %v708, 0.0
      %v717 = vmax.f32 %v709, 0.0
      %v718 = vmax.f32 %v710, 0.0
      %v719 = vpack.c.bf16 %v711, %v711
      %v720 = vpack.c.bf16 %v712, %v712
      %v721 = vpack.c.bf16 %v713, %v713
      %v722 = vpack.c.bf16 %v714, %v714
      %v723 = vpack.c.bf16 %v715, %v715
      %v724 = vpack.c.bf16 %v716, %v716
      %v725 = vpack.c.bf16 %v717, %v717
      %v726 = vpack.c.bf16 %v718, %v718
      %v727 = vld [vmem:[#allocation9] sm:$0xf]
      %v728 = vld [vmem:[#allocation9 + $0x4] sm:$0xf]
      %v729 = vld [vmem:[#allocation9 + $0x8] sm:$0xf]
      %v730 = vld [vmem:[#allocation9 + $0xc] sm:$0xf]
      %v731 = vld [vmem:[#allocation9 + $0x10] sm:$0xf]
      %v732 = vld [vmem:[#allocation9 + $0x14] sm:$0xf]
      %v733 = vld [vmem:[#allocation9 + $0x18] sm:$0xf]
      %v734 = vld [vmem:[#allocation9 + $0x1c] sm:$0xf]
      %v735 = vld [vmem:[#allocation9 + $0x20] sm:$0xf]
      %v736 = vld [vmem:[#allocation9 + $0x24] sm:$0xf]
      %v737 = vld [vmem:[#allocation9 + $0x28] sm:$0xf]
      %v738 = vld [vmem:[#allocation9 + $0x2c] sm:$0xf]
      %v739 = vld [vmem:[#allocation9 + $0x30] sm:$0xf]
      %v740 = vld [vmem:[#allocation9 + $0x34] sm:$0xf]
      %v741 = vld [vmem:[#allocation9 + $0x38] sm:$0xf]
      %v742 = vld [vmem:[#allocation9 + $0x3c] sm:$0xf]
      %v743 = vld [vmem:[#allocation9 + $0x40] sm:$0xf]
      %v744 = vld [vmem:[#allocation9 + $0x44] sm:$0xf]
      %v745 = vld [vmem:[#allocation9 + $0x48] sm:$0xf]
      %v746 = vld [vmem:[#allocation9 + $0x4c] sm:$0xf]
      %v747 = vld [vmem:[#allocation9 + $0x50] sm:$0xf]
      %v748 = vld [vmem:[#allocation9 + $0x54] sm:$0xf]
      %v749 = vld [vmem:[#allocation9 + $0x58] sm:$0xf]
      %v750 = vld [vmem:[#allocation9 + $0x5c] sm:$0xf]
      %v751 = vld [vmem:[#allocation9 + $0x60] sm:$0xf]
      %v752 = vld [vmem:[#allocation9 + $0x64] sm:$0xf]
      %v753 = vld [vmem:[#allocation9 + $0x68] sm:$0xf]
      %v754 = vld [vmem:[#allocation9 + $0x6c] sm:$0xf]
      %v755 = vld [vmem:[#allocation9 + $0x70] sm:$0xf]
      %v756 = vld [vmem:[#allocation9 + $0x74] sm:$0xf]
      %v757 = vld [vmem:[#allocation9 + $0x78] sm:$0xf]
      %v758 = vld [vmem:[#allocation9 + $0x7c] sm:$0xf]
      %v759 = vld [vmem:[#allocation9 + $0x80] sm:$0xf]
      %v760 = vld [vmem:[#allocation9 + $0x84] sm:$0xf]
      %v761 = vld [vmem:[#allocation9 + $0x88] sm:$0xf]
      %v762 = vld [vmem:[#allocation9 + $0x8c] sm:$0xf]
      %v763 = vld [vmem:[#allocation9 + $0x90] sm:$0xf]
      %v764 = vld [vmem:[#allocation9 + $0x94] sm:$0xf]
      %v765 = vld [vmem:[#allocation9 + $0x98] sm:$0xf]
      %v766 = vld [vmem:[#allocation9 + $0x9c] sm:$0xf]
      %v767 = vld [vmem:[#allocation9 + $0xa0] sm:$0xf]
      %v768 = vld [vmem:[#allocation9 + $0xa4] sm:$0xf]
      %v769 = vld [vmem:[#allocation9 + $0xa8] sm:$0xf]
      %v770 = vld [vmem:[#allocation9 + $0xac] sm:$0xf]
      %v771 = vld [vmem:[#allocation9 + $0xb0] sm:$0xf]
      %v772 = vld [vmem:[#allocation9 + $0xb4] sm:$0xf]
      %v773 = vld [vmem:[#allocation9 + $0xb8] sm:$0xf]
      %v774 = vld [vmem:[#allocation9 + $0xbc] sm:$0xf]
      %v775 = vld [vmem:[#allocation9 + $0xc0] sm:$0xf]
      %v776 = vld [vmem:[#allocation9 + $0xc4] sm:$0xf]
      %v777 = vld [vmem:[#allocation9 + $0xc8] sm:$0xf]
      %v778 = vld [vmem:[#allocation9 + $0xcc] sm:$0xf]
      %v779 = vld [vmem:[#allocation9 + $0xd0] sm:$0xf]
      %v780 = vld [vmem:[#allocation9 + $0xd4] sm:$0xf]
      %v781 = vld [vmem:[#allocation9 + $0xd8] sm:$0xf]
      %v782 = vld [vmem:[#allocation9 + $0xdc] sm:$0xf]
      %v783 = vld [vmem:[#allocation9 + $0xe0] sm:$0xf]
      %v784 = vld [vmem:[#allocation9 + $0xe4] sm:$0xf]
      %v785 = vld [vmem:[#allocation9 + $0xe8] sm:$0xf]
      %v786 = vld [vmem:[#allocation9 + $0xec] sm:$0xf]
      %v787 = vld [vmem:[#allocation9 + $0xf0] sm:$0xf]
      %v788 = vld [vmem:[#allocation9 + $0xf4] sm:$0xf]
      %v789 = vld [vmem:[#allocation9 + $0xf8] sm:$0xf]
      %v790 = vld [vmem:[#allocation9 + $0xfc] sm:$0xf]
      %v791 = vld [vmem:[#allocation9 + $0x100] sm:$0xf]
      %v792 = vld [vmem:[#allocation9 + $0x104] sm:$0xf]
      %v793 = vld [vmem:[#allocation9 + $0x108] sm:$0xf]
      %v794 = vld [vmem:[#allocation9 + $0x10c] sm:$0xf]
      %v795 = vld [vmem:[#allocation9 + $0x110] sm:$0xf]
      %v796 = vld [vmem:[#allocation9 + $0x114] sm:$0xf]
      %v797 = vld [vmem:[#allocation9 + $0x118] sm:$0xf]
      %v798 = vld [vmem:[#allocation9 + $0x11c] sm:$0xf]
      %v799 = vld [vmem:[#allocation9 + $0x120] sm:$0xf]
      %v800 = vld [vmem:[#allocation9 + $0x124] sm:$0xf]
      %v801 = vld [vmem:[#allocation9 + $0x128] sm:$0xf]
      %v802 = vld [vmem:[#allocation9 + $0x12c] sm:$0xf]
      %v803 = vld [vmem:[#allocation9 + $0x130] sm:$0xf]
      %v804 = vld [vmem:[#allocation9 + $0x134] sm:$0xf]
      %v805 = vld [vmem:[#allocation9 + $0x138] sm:$0xf]
      %v806 = vld [vmem:[#allocation9 + $0x13c] sm:$0xf]
      %v807 = vld [vmem:[#allocation9 + $0x140] sm:$0xf]
      %v808 = vld [vmem:[#allocation9 + $0x144] sm:$0xf]
      %v809 = vld [vmem:[#allocation9 + $0x148] sm:$0xf]
      %v810 = vld [vmem:[#allocation9 + $0x14c] sm:$0xf]
      %v811 = vld [vmem:[#allocation9 + $0x150] sm:$0xf]
      %v812 = vld [vmem:[#allocation9 + $0x154] sm:$0xf]
      %v813 = vld [vmem:[#allocation9 + $0x158] sm:$0xf]
      %v814 = vld [vmem:[#allocation9 + $0x15c] sm:$0xf]
      %v815 = vld [vmem:[#allocation9 + $0x160] sm:$0xf]
      %v816 = vld [vmem:[#allocation9 + $0x164] sm:$0xf]
      %v817 = vld [vmem:[#allocation9 + $0x168] sm:$0xf]
      %v818 = vld [vmem:[#allocation9 + $0x16c] sm:$0xf]
      %v819 = vld [vmem:[#allocation9 + $0x170] sm:$0xf]
      %v820 = vld [vmem:[#allocation9 + $0x174] sm:$0xf]
      %v821 = vld [vmem:[#allocation9 + $0x178] sm:$0xf]
      %v822 = vld [vmem:[#allocation9 + $0x17c] sm:$0xf]
      %v823 = vld [vmem:[#allocation9 + $0x180] sm:$0xf]
      %v824 = vld [vmem:[#allocation9 + $0x184] sm:$0xf]
      %v825 = vld [vmem:[#allocation9 + $0x188] sm:$0xf]
      %v826 = vld [vmem:[#allocation9 + $0x18c] sm:$0xf]
      %v827 = vld [vmem:[#allocation9 + $0x190] sm:$0xf]
      %v828 = vld [vmem:[#allocation9 + $0x194] sm:$0xf]
      %v829 = vld [vmem:[#allocation9 + $0x198] sm:$0xf]
      %v830 = vld [vmem:[#allocation9 + $0x19c] sm:$0xf]
      %v831 = vld [vmem:[#allocation9 + $0x1a0] sm:$0xf]
      %v832 = vld [vmem:[#allocation9 + $0x1a4] sm:$0xf]
      %v833 = vld [vmem:[#allocation9 + $0x1a8] sm:$0xf]
      %v834 = vld [vmem:[#allocation9 + $0x1ac] sm:$0xf]
      %v835 = vld [vmem:[#allocation9 + $0x1b0] sm:$0xf]
      %v836 = vld [vmem:[#allocation9 + $0x1b4] sm:$0xf]
      %v837 = vld [vmem:[#allocation9 + $0x1b8] sm:$0xf]
      %v838 = vld [vmem:[#allocation9 + $0x1bc] sm:$0xf]
      %v839 = vld [vmem:[#allocation9 + $0x1c0] sm:$0xf]
      %v840 = vld [vmem:[#allocation9 + $0x1c4] sm:$0xf]
      %v841 = vld [vmem:[#allocation9 + $0x1c8] sm:$0xf]
      %v842 = vld [vmem:[#allocation9 + $0x1cc] sm:$0xf]
      %v843 = vld [vmem:[#allocation9 + $0x1d0] sm:$0xf]
      %v844 = vld [vmem:[#allocation9 + $0x1d4] sm:$0xf]
      %v845 = vld [vmem:[#allocation9 + $0x1d8] sm:$0xf]
      %v846 = vld [vmem:[#allocation9 + $0x1dc] sm:$0xf]
      %v847 = vld [vmem:[#allocation9 + $0x1e0] sm:$0xf]
      %v848 = vld [vmem:[#allocation9 + $0x1e4] sm:$0xf]
      %v849 = vld [vmem:[#allocation9 + $0x1e8] sm:$0xf]
      %v850 = vld [vmem:[#allocation9 + $0x1ec] sm:$0xf]
      %v851 = vld [vmem:[#allocation9 + $0x1f0] sm:$0xf]
      %v852 = vld [vmem:[#allocation9 + $0x1f4] sm:$0xf]
      %v853 = vld [vmem:[#allocation9 + $0x1f8] sm:$0xf]
      %v854 = vld [vmem:[#allocation9 + $0x1fc] sm:$0xf]
      %v855 = vld [vmem:[%s4] sm:$0x1]
      %v857 = vlaneseq
      %v858 = vshrl.u32 %v857, 7
      %v859 = vsub.s32 0, %v858
      %v860 = vrot.slane %v855, %v859
      %v990 = vunpack.c.l.b16 %v727
      %v991 = vunpack.c.l.b16 %v728
      %v992 = vunpack.c.l.b16 %v729
      %v993 = vunpack.c.l.b16 %v730
      %v994 = vunpack.c.l.b16 %v731
      %v995 = vunpack.c.l.b16 %v732
      %v996 = vunpack.c.l.b16 %v733
      %v997 = vunpack.c.l.b16 %v734
      %v998 = vunpack.c.l.b16 %v735
      %v999 = vunpack.c.l.b16 %v736
      %v1000 = vunpack.c.l.b16 %v737
      %v1001 = vunpack.c.l.b16 %v738
      %v1002 = vunpack.c.l.b16 %v739
      %v1003 = vunpack.c.l.b16 %v740
      %v1004 = vunpack.c.l.b16 %v741
      %v1005 = vunpack.c.l.b16 %v742
      %v1006 = vunpack.c.l.b16 %v743
      %v1007 = vunpack.c.l.b16 %v744
      %v1008 = vunpack.c.l.b16 %v745
      %v1009 = vunpack.c.l.b16 %v746
      %v1010 = vunpack.c.l.b16 %v747
      %v1011 = vunpack.c.l.b16 %v748
      %v1012 = vunpack.c.l.b16 %v749
      %v1013 = vunpack.c.l.b16 %v750
      %v1014 = vunpack.c.l.b16 %v751
      %v1015 = vunpack.c.l.b16 %v752
      %v1016 = vunpack.c.l.b16 %v753
      %v1017 = vunpack.c.l.b16 %v754
      %v1018 = vunpack.c.l.b16 %v755
      %v1019 = vunpack.c.l.b16 %v756
      %v1020 = vunpack.c.l.b16 %v757
      %v1021 = vunpack.c.l.b16 %v758
      %v1022 = vunpack.c.l.b16 %v759
      %v1023 = vunpack.c.l.b16 %v760
      %v1024 = vunpack.c.l.b16 %v761
      %v1025 = vunpack.c.l.b16 %v762
      %v1026 = vunpack.c.l.b16 %v763
      %v1027 = vunpack.c.l.b16 %v764
      %v1028 = vunpack.c.l.b16 %v765
      %v1029 = vunpack.c.l.b16 %v766
      %v1030 = vunpack.c.l.b16 %v767
      %v1031 = vunpack.c.l.b16 %v768
      %v1032 = vunpack.c.l.b16 %v769
      %v1033 = vunpack.c.l.b16 %v770
      %v1034 = vunpack.c.l.b16 %v771
      %v1035 = vunpack.c.l.b16 %v772
      %v1036 = vunpack.c.l.b16 %v773
      %v1037 = vunpack.c.l.b16 %v774
      %v1038 = vunpack.c.l.b16 %v775
      %v1039 = vunpack.c.l.b16 %v776
      %v1040 = vunpack.c.l.b16 %v777
      %v1041 = vunpack.c.l.b16 %v778
      %v1042 = vunpack.c.l.b16 %v779
      %v1043 = vunpack.c.l.b16 %v780
      %v1044 = vunpack.c.l.b16 %v781
      %v1045 = vunpack.c.l.b16 %v782
      %v1046 = vunpack.c.l.b16 %v783
      %v1047 = vunpack.c.l.b16 %v784
      %v1048 = vunpack.c.l.b16 %v785
      %v1049 = vunpack.c.l.b16 %v786
      %v1050 = vunpack.c.l.b16 %v787
      %v1051 = vunpack.c.l.b16 %v788
      %v1052 = vunpack.c.l.b16 %v789
      %v1053 = vunpack.c.l.b16 %v790
      %v1054 = vunpack.c.l.b16 %v791
      %v1055 = vunpack.c.l.b16 %v792
      %v1056 = vunpack.c.l.b16 %v793
      %v1057 = vunpack.c.l.b16 %v794
      %v1058 = vunpack.c.l.b16 %v795
      %v1059 = vunpack.c.l.b16 %v796
      %v1060 = vunpack.c.l.b16 %v797
      %v1061 = vunpack.c.l.b16 %v798
      %v1062 = vunpack.c.l.b16 %v799
      %v1063 = vunpack.c.l.b16 %v800
      %v1064 = vunpack.c.l.b16 %v801
      %v1065 = vunpack.c.l.b16 %v802
      %v1066 = vunpack.c.l.b16 %v803
      %v1067 = vunpack.c.l.b16 %v804
      %v1068 = vunpack.c.l.b16 %v805
      %v1069 = vunpack.c.l.b16 %v806
      %v1070 = vunpack.c.l.b16 %v807
      %v1071 = vunpack.c.l.b16 %v808
      %v1072 = vunpack.c.l.b16 %v809
      %v1073 = vunpack.c.l.b16 %v810
      %v1074 = vunpack.c.l.b16 %v811
      %v1075 = vunpack.c.l.b16 %v812
      %v1076 = vunpack.c.l.b16 %v813
      %v1077 = vunpack.c.l.b16 %v814
      %v1078 = vunpack.c.l.b16 %v815
      %v1079 = vunpack.c.l.b16 %v816
      %v1080 = vunpack.c.l.b16 %v817
      %v1081 = vunpack.c.l.b16 %v818
      %v1082 = vunpack.c.l.b16 %v819
      %v1083 = vunpack.c.l.b16 %v820
      %v1084 = vunpack.c.l.b16 %v821
      %v1085 = vunpack.c.l.b16 %v822
      %v1086 = vunpack.c.l.b16 %v823
      %v1087 = vunpack.c.l.b16 %v824
      %v1088 = vunpack.c.l.b16 %v825
      %v1089 = vunpack.c.l.b16 %v826
      %v1090 = vunpack.c.l.b16 %v827
      %v1091 = vunpack.c.l.b16 %v828
      %v1092 = vunpack.c.l.b16 %v829
      %v1093 = vunpack.c.l.b16 %v830
      %v1094 = vunpack.c.l.b16 %v831
      %v1095 = vunpack.c.l.b16 %v832
      %v1096 = vunpack.c.l.b16 %v833
      %v1097 = vunpack.c.l.b16 %v834
      %v1098 = vunpack.c.l.b16 %v835
      %v1099 = vunpack.c.l.b16 %v836
      %v1100 = vunpack.c.l.b16 %v837
      %v1101 = vunpack.c.l.b16 %v838
      %v1102 = vunpack.c.l.b16 %v839
      %v1103 = vunpack.c.l.b16 %v840
      %v1104 = vunpack.c.l.b16 %v841
      %v1105 = vunpack.c.l.b16 %v842
      %v1106 = vunpack.c.l.b16 %v843
      %v1107 = vunpack.c.l.b16 %v844
      %v1108 = vunpack.c.l.b16 %v845
      %v1109 = vunpack.c.l.b16 %v846
      %v1110 = vunpack.c.l.b16 %v847
      %v1111 = vunpack.c.l.b16 %v848
      %v1112 = vunpack.c.l.b16 %v849
      %v1113 = vunpack.c.l.b16 %v850
      %v1114 = vunpack.c.l.b16 %v851
      %v1115 = vunpack.c.l.b16 %v852
      %v1116 = vunpack.c.l.b16 %v853
      %v1117 = vunpack.c.l.b16 %v854
      %v1118 = vpack.c.b16 %v991, %v990
      %v1119 = vpack.c.b16 %v993, %v992
      %v1120 = vpack.c.b16 %v995, %v994
      %v1121 = vpack.c.b16 %v997, %v996
      %v1122 = vpack.c.b16 %v999, %v998
      %v1123 = vpack.c.b16 %v1001, %v1000
      %v1124 = vpack.c.b16 %v1003, %v1002
      %v1125 = vpack.c.b16 %v1005, %v1004
      %v1126 = vpack.c.b16 %v1007, %v1006
      %v1127 = vpack.c.b16 %v1009, %v1008
      %v1128 = vpack.c.b16 %v1011, %v1010
      %v1129 = vpack.c.b16 %v1013, %v1012
      %v1130 = vpack.c.b16 %v1015, %v1014
      %v1131 = vpack.c.b16 %v1017, %v1016
      %v1132 = vpack.c.b16 %v1019, %v1018
      %v1133 = vpack.c.b16 %v1021, %v1020
      %v1134 = vpack.c.b16 %v1023, %v1022
      %v1135 = vpack.c.b16 %v1025, %v1024
      %v1136 = vpack.c.b16 %v1027, %v1026
      %v1137 = vpack.c.b16 %v1029, %v1028
      %v1138 = vpack.c.b16 %v1031, %v1030
      %v1139 = vpack.c.b16 %v1033, %v1032
      %v1140 = vpack.c.b16 %v1035, %v1034
      %v1141 = vpack.c.b16 %v1037, %v1036
      %v1142 = vpack.c.b16 %v1039, %v1038
      %v1143 = vpack.c.b16 %v1041, %v1040
      %v1144 = vpack.c.b16 %v1043, %v1042
      %v1145 = vpack.c.b16 %v1045, %v1044
      %v1146 = vpack.c.b16 %v1047, %v1046
      %v1147 = vpack.c.b16 %v1049, %v1048
      %v1148 = vpack.c.b16 %v1051, %v1050
      %v1149 = vpack.c.b16 %v1053, %v1052
      %v1150 = vpack.c.b16 %v1055, %v1054
      %v1151 = vpack.c.b16 %v1057, %v1056
      %v1152 = vpack.c.b16 %v1059, %v1058
      %v1153 = vpack.c.b16 %v1061, %v1060
      %v1154 = vpack.c.b16 %v1063, %v1062
      %v1155 = vpack.c.b16 %v1065, %v1064
      %v1156 = vpack.c.b16 %v1067, %v1066
      %v1157 = vpack.c.b16 %v1069, %v1068
      %v1158 = vpack.c.b16 %v1071, %v1070
      %v1159 = vpack.c.b16 %v1073, %v1072
      %v1160 = vpack.c.b16 %v1075, %v1074
      %v1161 = vpack.c.b16 %v1077, %v1076
      %v1162 = vpack.c.b16 %v1079, %v1078
      %v1163 = vpack.c.b16 %v1081, %v1080
      %v1164 = vpack.c.b16 %v1083, %v1082
      %v1165 = vpack.c.b16 %v1085, %v1084
      %v1166 = vpack.c.b16 %v1087, %v1086
      %v1167 = vpack.c.b16 %v1089, %v1088
      %v1168 = vpack.c.b16 %v1091, %v1090
      %v1169 = vpack.c.b16 %v1093, %v1092
      %v1170 = vpack.c.b16 %v1095, %v1094
      %v1171 = vpack.c.b16 %v1097, %v1096
      %v1172 = vpack.c.b16 %v1099, %v1098
      %v1173 = vpack.c.b16 %v1101, %v1100
      %v1174 = vpack.c.b16 %v1103, %v1102
      %v1175 = vpack.c.b16 %v1105, %v1104
      %v1176 = vpack.c.b16 %v1107, %v1106
      %v1177 = vpack.c.b16 %v1109, %v1108
      %v1178 = vpack.c.b16 %v1111, %v1110
      %v1179 = vpack.c.b16 %v1113, %v1112
      %v1180 = vpack.c.b16 %v1115, %v1114
      %v1181 = vpack.c.b16 %v1117, %v1116
      %1246 = vmatprep.subr.bf16.mxu0 0
      %1247 = vmatpush1.bf16.msra.mxu0 %v1125
      %1248 = vmatprep.subr.bf16.mxu0 0
      %1249 = vmatpush1.bf16.msra.mxu0 %v1124
      %1250 = vmatprep.subr.bf16.mxu0 0
      %1251 = vmatpush1.bf16.msra.mxu0 %v1123
      %1252 = vmatprep.subr.bf16.mxu0 0
      %1253 = vmatpush1.bf16.msra.mxu0 %v1122
      %1254 = vmatprep.subr.bf16.mxu0 0
      %1255 = vmatpush1.bf16.msra.mxu0 %v1121
      %1256 = vmatprep.subr.bf16.mxu0 0
      %1257 = vmatpush1.bf16.msra.mxu0 %v1120
      %1258 = vmatprep.subr.bf16.mxu0 0
      %1259 = vmatpush1.bf16.msra.mxu0 %v1119
      %1260 = vmatprep.subr.bf16.mxu0 0
      %1261 = vmatpush1.bf16.msra.mxu0 %v1118
      %1262 = vmatprep.subr.bf16.mxu0 0
      %1263 = vmatpush2.bf16.msra.mxu0 %v1133
      %1264 = vmatprep.subr.bf16.mxu0 0
      %1265 = vmatpush2.bf16.msra.mxu0 %v1132
      %1266 = vmatprep.subr.bf16.mxu0 0
      %1267 = vmatpush2.bf16.msra.mxu0 %v1131
      %1268 = vmatprep.subr.bf16.mxu0 0
      %1269 = vmatpush2.bf16.msra.mxu0 %v1130
      %1270 = vmatprep.subr.bf16.mxu0 0
      %1271 = vmatpush2.bf16.msra.mxu0 %v1129
      %1272 = vmatprep.subr.bf16.mxu0 0
      %1273 = vmatpush2.bf16.msra.mxu0 %v1128
      %1274 = vmatprep.subr.bf16.mxu0 0
      %1275 = vmatpush2.bf16.msra.mxu0 %v1127
      %1276 = vmatprep.subr.bf16.mxu0 0
      %1277 = vmatpush2.bf16.msra.mxu0 %v1126
      %1278 = vmatprep.mubr.bf16.mxu0 %v720
      %1279 = vmatmul.mubr.bf16.gmra.mxu0 %v719
      %v1280 = vpop.f32.mrf.mxu0
      %v1281 = vadd.f32 %v860, %v1280
      %v1282 = vpop.f32.mrf.mxu0
      %v1283 = vpop.f32.mrf.mxu0
      %v1284 = vpop.f32.mrf.mxu0
      %1285 = vdwg.mxu0
      %1286 = vmatprep.subr.bf16.mxu0 0
      %1287 = vmatpush1.bf16.msra.mxu0 %v1141
      %1288 = vmatprep.subr.bf16.mxu0 0
      %1289 = vmatpush1.bf16.msra.mxu0 %v1140
      %1290 = vmatprep.subr.bf16.mxu0 0
      %1291 = vmatpush1.bf16.msra.mxu0 %v1139
      %1292 = vmatprep.subr.bf16.mxu0 0
      %1293 = vmatpush1.bf16.msra.mxu0 %v1138
      %1294 = vmatprep.subr.bf16.mxu0 0
      %1295 = vmatpush1.bf16.msra.mxu0 %v1137
      %1296 = vmatprep.subr.bf16.mxu0 0
      %1297 = vmatpush1.bf16.msra.mxu0 %v1136
      %1298 = vmatprep.subr.bf16.mxu0 0
      %1299 = vmatpush1.bf16.msra.mxu0 %v1135
      %1300 = vmatprep.subr.bf16.mxu0 0
      %1301 = vmatpush1.bf16.msra.mxu0 %v1134
      %1302 = vmatprep.subr.bf16.mxu0 0
      %1303 = vmatpush2.bf16.msra.mxu0 %v1149
      %1304 = vmatprep.subr.bf16.mxu0 0
      %1305 = vmatpush2.bf16.msra.mxu0 %v1148
      %1306 = vmatprep.subr.bf16.mxu0 0
      %1307 = vmatpush2.bf16.msra.mxu0 %v1147
      %1308 = vmatprep.subr.bf16.mxu0 0
      %1309 = vmatpush2.bf16.msra.mxu0 %v1146
      %1310 = vmatprep.subr.bf16.mxu0 0
      %1311 = vmatpush2.bf16.msra.mxu0 %v1145
      %1312 = vmatprep.subr.bf16.mxu0 0
      %1313 = vmatpush2.bf16.msra.mxu0 %v1144
      %1314 = vmatprep.subr.bf16.mxu0 0
      %1315 = vmatpush2.bf16.msra.mxu0 %v1143
      %1316 = vmatprep.subr.bf16.mxu0 0
      %1317 = vmatpush2.bf16.msra.mxu0 %v1142
      %1318 = vmatprep.mubr.bf16.mxu0 %v722
      %1319 = vmatmul.mubr.bf16.gmra.mxu0 %v721
      %v1320 = vpop.f32.mrf.mxu0
      %v1321 = vadd.f32 %v1281, %v1320
      %v1322 = vpop.f32.mrf.mxu0
      %v1323 = vpop.f32.mrf.mxu0
      %v1324 = vpop.f32.mrf.mxu0
      %1325 = vdwg.mxu0
      %1326 = vmatprep.subr.bf16.mxu0 0
      %1327 = vmatpush1.bf16.msra.mxu0 %v1157
      %1328 = vmatprep.subr.bf16.mxu0 0
      %1329 = vmatpush1.bf16.msra.mxu0 %v1156
      %1330 = vmatprep.subr.bf16.mxu0 0
      %1331 = vmatpush1.bf16.msra.mxu0 %v1155
      %1332 = vmatprep.subr.bf16.mxu0 0
      %1333 = vmatpush1.bf16.msra.mxu0 %v1154
      %1334 = vmatprep.subr.bf16.mxu0 0
      %1335 = vmatpush1.bf16.msra.mxu0 %v1153
      %1336 = vmatprep.subr.bf16.mxu0 0
      %1337 = vmatpush1.bf16.msra.mxu0 %v1152
      %1338 = vmatprep.subr.bf16.mxu0 0
      %1339 = vmatpush1.bf16.msra.mxu0 %v1151
      %1340 = vmatprep.subr.bf16.mxu0 0
      %1341 = vmatpush1.bf16.msra.mxu0 %v1150
      %1342 = vmatprep.subr.bf16.mxu0 0
      %1343 = vmatpush2.bf16.msra.mxu0 %v1165
      %1344 = vmatprep.subr.bf16.mxu0 0
      %1345 = vmatpush2.bf16.msra.mxu0 %v1164
      %1346 = vmatprep.subr.bf16.mxu0 0
      %1347 = vmatpush2.bf16.msra.mxu0 %v1163
      %1348 = vmatprep.subr.bf16.mxu0 0
      %1349 = vmatpush2.bf16.msra.mxu0 %v1162
      %1350 = vmatprep.subr.bf16.mxu0 0
      %1351 = vmatpush2.bf16.msra.mxu0 %v1161
      %1352 = vmatprep.subr.bf16.mxu0 0
      %1353 = vmatpush2.bf16.msra.mxu0 %v1160
      %1354 = vmatprep.subr.bf16.mxu0 0
      %1355 = vmatpush2.bf16.msra.mxu0 %v1159
      %1356 = vmatprep.subr.bf16.mxu0 0
      %1357 = vmatpush2.bf16.msra.mxu0 %v1158
      %1358 = vmatprep.mubr.bf16.mxu0 %v724
      %1359 = vmatmul.mubr.bf16.gmra.mxu0 %v723
      %v1360 = vpop.f32.mrf.mxu0
      %v1361 = vadd.f32 %v1321, %v1360
      %v1362 = vpop.f32.mrf.mxu0
      %v1363 = vpop.f32.mrf.mxu0
      %v1364 = vpop.f32.mrf.mxu0
      %1365 = vdwg.mxu0
      %1366 = vmatprep.subr.bf16.mxu0 0
      %1367 = vmatpush1.bf16.msra.mxu0 %v1173
      %1368 = vmatprep.subr.bf16.mxu0 0
      %1369 = vmatpush1.bf16.msra.mxu0 %v1172
      %1370 = vmatprep.subr.bf16.mxu0 0
      %1371 = vmatpush1.bf16.msra.mxu0 %v1171
      %1372 = vmatprep.subr.bf16.mxu0 0
      %1373 = vmatpush1.bf16.msra.mxu0 %v1170
      %1374 = vmatprep.subr.bf16.mxu0 0
      %1375 = vmatpush1.bf16.msra.mxu0 %v1169
      %1376 = vmatprep.subr.bf16.mxu0 0
      %1377 = vmatpush1.bf16.msra.mxu0 %v1168
      %1378 = vmatprep.subr.bf16.mxu0 0
      %1379 = vmatpush1.bf16.msra.mxu0 %v1167
      %1380 = vmatprep.subr.bf16.mxu0 0
      %1381 = vmatpush1.bf16.msra.mxu0 %v1166
      %1382 = vmatprep.subr.bf16.mxu0 0
      %1383 = vmatpush2.bf16.msra.mxu0 %v1181
      %1384 = vmatprep.subr.bf16.mxu0 0
      %1385 = vmatpush2.bf16.msra.mxu0 %v1180
      %1386 = vmatprep.subr.bf16.mxu0 0
      %1387 = vmatpush2.bf16.msra.mxu0 %v1179
      %1388 = vmatprep.subr.bf16.mxu0 0
      %1389 = vmatpush2.bf16.msra.mxu0 %v1178
      %1390 = vmatprep.subr.bf16.mxu0 0
      %1391 = vmatpush2.bf16.msra.mxu0 %v1177
      %1392 = vmatprep.subr.bf16.mxu0 0
      %1393 = vmatpush2.bf16.msra.mxu0 %v1176
      %1394 = vmatprep.subr.bf16.mxu0 0
      %1395 = vmatpush2.bf16.msra.mxu0 %v1175
      %1396 = vmatprep.subr.bf16.mxu0 0
      %1397 = vmatpush2.bf16.msra.mxu0 %v1174
      %1398 = vmatprep.mubr.bf16.mxu0 %v726
      %1399 = vmatmul.mubr.bf16.gmra.mxu0 %v725
      %v1400 = vpop.f32.mrf.mxu0
      %v1401 = vadd.f32 %v1361, %v1400
      %v1402 = vpop.f32.mrf.mxu0
      %v1403 = vpop.f32.mrf.mxu0
      %v1404 = vpop.f32.mrf.mxu0
      %1405 = vdwg.mxu0
      %1406 = vst [vmem:[#allocation11] sm:$0xff] %v1401
    $region45: #{tpu_custom_call.1} parent=1 // pred_fallthru
      _
    // Predicated region
    $region46: #{tpu_custom_call.1} parent=1 // pred_check
      _
    $region47: #{tpu_custom_call.1} parent=1 // pred_check_branch
      %1408 = sbr.rel (0) target = $region49
    $region48: #{tpu_custom_call.1} parent=1 // pred_region
      %s1410 = ssub.s32 128, 128
      %1411 = vsyncadd [#allocation5], %s1410
      %s1413 = sshll.u32 [#allocation11], 4
      %s1414 = int_to_ptr.vmem [resolvable:$true] %s1413
      %1416 = dma.vmem_to_hbm [thread:$0]  %s1414, 128, %s5, [#allocation5]
    $region49: #{tpu_custom_call.1} parent=1 // pred_fallthru
      _
    // Predicated region
    $region50: #{tpu_custom_call.1} parent=1 // pred_check
      _
    $region51: #{tpu_custom_call.1} parent=1 // pred_check_branch
      %1418 = sbr.rel (0) target = $region53
    $region52: #{tpu_custom_call.1} parent=1 // pred_region
      %1419 = dma.done [#allocation5], 128
    $region53: #{tpu_custom_call.1} parent=1 // pred_fallthru
      _
    %1420 = vsyncpa [#allocation4], 1
    %1421 = vsyncpa [#allocation7], 1
    %1422 = vsyncpa [#allocation10], 1
    %1423 = vsyncpa [#allocation5], 1

</llo_original>
